<compile_context>
chip_gen: v5e
topology: v5e:2x2
jax: 0.10.0
libtpu: 0.0.40
codegen_flags: <defaults>
</compile_context>

<pallas_src>
import functools

import jax
import jax.numpy as jnp
from jax import lax
from jax.experimental import pallas as pl
from jax.experimental.pallas import tpu as pltpu

LN_EPS = 1e-5        # nn.LayerNorm default
NORM_EPS = 1e-12     # F.normalize default


def _round_up(n, m):
    return ((n + m - 1) // m) * m


def _projector_kernel(x_ref, w1_ref, b1_ref, g_ref, beta_ref, w2_ref, b2_ref,
                      o_ref, *, h_real):
    # ---- linear1 (bf16 operands, f32 accumulation on the MXU) ----
    h = jnp.dot(x_ref[...], w1_ref[...],
                preferred_element_type=jnp.float32) + b1_ref[...]

    # ---- LayerNorm over the REAL hidden width (f32) ----
    # Padded hidden columns of h are exactly 0 (padded w1 columns / b1 entries are 0),
    # so sums over all columns equal sums over the real ones; only the divisor and the
    # variance mask need the real width.
    h_pad = h.shape[-1]
    col = lax.broadcasted_iota(jnp.int32, (1, h_pad), 1)
    maskf = (col < h_real).astype(jnp.float32)
    inv_h = jnp.float32(1.0 / h_real)

    mean = jnp.sum(h, axis=-1, keepdims=True) * inv_h
    centered = (h - mean) * maskf                       # zero padded columns
    var = jnp.sum(centered * centered, axis=-1, keepdims=True) * inv_h
    ln = centered * lax.rsqrt(var + LN_EPS) * g_ref[...] + beta_ref[...]

    # ---- ReLU ----
    r = jnp.maximum(ln, 0.0)

    # ---- linear2 (bf16 operands, f32 accumulation) ----
    y = jnp.dot(r.astype(w2_ref.dtype), w2_ref[...],
                preferred_element_type=jnp.float32) + b2_ref[...]

    # ---- F.normalize(p=2, dim=1) ----
    # Padded output columns are exactly 0, so they do not affect the norm.
    nrm = jnp.sqrt(jnp.sum(y * y, axis=-1, keepdims=True))
    inv = pl.reciprocal(jnp.maximum(nrm, NORM_EPS), approx=True)
    o_ref[...] = (y * inv).astype(o_ref.dtype)


def projector_forward(x, params, *, batch_tile=256):
    """x: (B, input_size). params: w1 (In,H), b1 (H,), gamma (H,), beta (H,), w2 (H,Out), b2 (Out,)."""
    B, In = x.shape
    H = params["w1"].shape[1]
    Out = params["w2"].shape[1]

    # Lane-dense (128-aligned) feature dims, 8-aligned batch tile, padded batch.
    In_p = _round_up(In, 128)
    H_p = _round_up(H, 128)
    Out_p = _round_up(Out, 128)
    bt = _round_up(min(batch_tile, _round_up(B, 8)), 8)
    B_p = _round_up(B, bt)

    def pad2(a, rows, cols):
        a = a.reshape(-1, a.shape[-1]) if a.ndim == 2 else a.reshape(1, -1)
        return jnp.pad(a, ((0, rows - a.shape[0]), (0, cols - a.shape[1])))

    # bf16 for MXU operands; f32 for everything that feeds elementwise math.
    x_p = pad2(x, B_p, In_p).astype(jnp.bfloat16)
    w1 = pad2(params["w1"], In_p, H_p).astype(jnp.bfloat16)
    w2 = pad2(params["w2"], H_p, Out_p).astype(jnp.bfloat16)
    b1 = pad2(params["b1"], 1, H_p).astype(jnp.float32)
    gamma = pad2(params["gamma"], 1, H_p).astype(jnp.float32)   # padded entries = 0
    beta = pad2(params["beta"], 1, H_p).astype(jnp.float32)     # padded entries = 0
    b2 = pad2(params["b2"], 1, Out_p).astype(jnp.float32)

    grid = (B_p // bt,)
    kernel = functools.partial(_projector_kernel, h_real=H)

    def const_spec(shape):
        # Resident block, identical for every grid step (weights / biases / LN params).
        return pl.BlockSpec(shape, lambda i: (0,) * len(shape))

    # TODO(synk): for very large hidden sizes on v7x (64 MiB VMEM), tile the In (K)
    # dimension with an f32 accumulator instead of one resident w1 block.
    out = pl.pallas_call(
        kernel,
        out_shape=jax.ShapeDtypeStruct((B_p, Out_p), jnp.float32),
        grid_spec=pltpu.PrefetchScalarGridSpec(
            num_scalar_prefetch=0,
            grid=grid,
            in_specs=[
                pl.BlockSpec((bt, In_p), lambda i: (i, 0)),     # x tile (per grid step)
                const_spec((In_p, H_p)),                        # w1
                const_spec((1, H_p)),                           # b1
                const_spec((1, H_p)),                           # gamma
                const_spec((1, H_p)),                           # beta
                const_spec((H_p, Out_p)),                       # w2
                const_spec((1, Out_p)),                         # b2
            ],
            out_specs=pl.BlockSpec((bt, Out_p), lambda i: (i, 0)),
        ),
        compiler_params=pltpu.CompilerParams(
            dimension_semantics=("parallel",),
            vmem_limit_bytes=48 * 1024 * 1024,
        ),
    )(x_p, w1, b1, gamma, beta, w2, b2)

    # Strip batch / output-feature padding.
    return out[:B, :Out]


def init_params(key, input_size, hidden_size, output_size, dtype=jnp.float32):
    k1, k2, k3, k4, k5, k6 = jax.random.split(key, 6)
    lim1 = 1.0 / (input_size ** 0.5)
    lim2 = 1.0 / (hidden_size ** 0.5)
    return {
        "w1": jax.random.uniform(k1, (input_size, hidden_size), dtype, -lim1, lim1),
        "b1": jax.random.uniform(k2, (hidden_size,), dtype, -lim1, lim1),
        # Non-trivial LN params so padding bugs would be caught.
        "gamma": 1.0 + 0.1 * jax.random.normal(k3, (hidden_size,), dtype),
        "beta": 0.1 * jax.random.normal(k4, (hidden_size,), dtype),
        "w2": jax.random.uniform(k5, (hidden_size, output_size), dtype, -lim2, lim2),
        "b2": jax.random.uniform(k6, (output_size,), dtype, -lim2, lim2),
    }


def projector_ref(x, p, *, mxu_dtype=jnp.float32):
    """Pure-JAX reference of the PyTorch forward (optionally with bf16 matmul operands)."""
    w1 = p["w1"].astype(mxu_dtype)
    w2 = p["w2"].astype(mxu_dtype)
    h = jnp.dot(x.astype(mxu_dtype), w1, preferred_element_type=jnp.float32) + p["b1"]
    mean = h.mean(-1, keepdims=True)
    var = ((h - mean) ** 2).mean(-1, keepdims=True)
    ln = (h - mean) / jnp.sqrt(var + LN_EPS) * p["gamma"] + p["beta"]
    r = jnp.maximum(ln, 0.0)
    y = jnp.dot(r.astype(mxu_dtype), w2, preferred_element_type=jnp.float32) + p["b2"]
    n = jnp.sqrt(jnp.sum(y * y, -1, keepdims=True))
    return y / jnp.maximum(n, NORM_EPS)


if __name__ == "__main__":
    key = jax.random.PRNGKey(0)
    kx, kp = jax.random.split(key)

    # Small demo shapes; batch deliberately NOT a multiple of the tile to exercise padding,
    # and > one tile so the parallel grid axis has multiple steps.
    batch, input_size, hidden_size, output_size = 200, 32, 64, 16
    x = jax.random.normal(kx, (batch, input_size), jnp.float32)
    params = init_params(kp, input_size, hidden_size, output_size)

    out = projector_forward(x, params, batch_tile=128)
    out = jax.block_until_ready(out)
    assert out.shape == (batch, output_size)

    ref_bf16 = projector_ref(x, params, mxu_dtype=jnp.bfloat16)
    ref_f32 = projector_ref(x, params, mxu_dtype=jnp.float32)
    assert jnp.allclose(out, ref_bf16, atol=1e-2, rtol=1e-2), "mismatch vs bf16-matmul reference"
    assert jnp.allclose(out, ref_f32, atol=5e-2, rtol=5e-2), "mismatch vs f32 reference"

    print("KERNEL_OK")
</pallas_src>

<mosaic_0001>
module attributes {stable_mosaic.version = 11 : i64} {
  func.func @_projector_kernel(%arg0: i32, %arg1: memref<128x128xbf16, #tpu.memory_space<vmem>>, %arg2: memref<128x128xbf16, #tpu.memory_space<vmem>>, %arg3: memref<1x128xf32, #tpu.memory_space<vmem>>, %arg4: memref<1x128xf32, #tpu.memory_space<vmem>>, %arg5: memref<1x128xf32, #tpu.memory_space<vmem>>, %arg6: memref<128x128xbf16, #tpu.memory_space<vmem>>, %arg7: memref<1x128xf32, #tpu.memory_space<vmem>>, %arg8: memref<128x128xf32, #tpu.memory_space<vmem>>) attributes {dimension_semantics = [#tpu.dimension_semantics<parallel>], iteration_bounds = array<i64: 2>, scalar_prefetch = 0 : i64, scratch_operands = 0 : i64, tpu.core_type = #tpu.core_type<tc>, window_params = [{transform_indices = @transform_0, window_bounds = array<i64: 128, 128>}, {pipeline_mode = #tpu.pipeline_mode<synchronous>, transform_indices = @transform_1, window_bounds = array<i64: 128, 128>}, {pipeline_mode = #tpu.pipeline_mode<synchronous>, transform_indices = @transform_2, window_bounds = array<i64: 1, 128>}, {pipeline_mode = #tpu.pipeline_mode<synchronous>, transform_indices = @transform_3, window_bounds = array<i64: 1, 128>}, {pipeline_mode = #tpu.pipeline_mode<synchronous>, transform_indices = @transform_4, window_bounds = array<i64: 1, 128>}, {pipeline_mode = #tpu.pipeline_mode<synchronous>, transform_indices = @transform_5, window_bounds = array<i64: 128, 128>}, {pipeline_mode = #tpu.pipeline_mode<synchronous>, transform_indices = @transform_6, window_bounds = array<i64: 1, 128>}, {transform_indices = @transform_7, window_bounds = array<i64: 128, 128>}]} {
    %c0 = arith.constant 0 : index
    %c0_0 = arith.constant 0 : index
    %0 = vector.load %arg1[%c0, %c0_0] : memref<128x128xbf16, #tpu.memory_space<vmem>>, vector<128x128xbf16>
    %c0_1 = arith.constant 0 : index
    %c0_2 = arith.constant 0 : index
    %1 = vector.load %arg2[%c0_1, %c0_2] : memref<128x128xbf16, #tpu.memory_space<vmem>>, vector<128x128xbf16>
    %cst = arith.constant dense<0.000000e+00> : vector<128x128xf32>
    %2 = tpu.matmul %0, %1, %cst {dimension_numbers = #tpu.dot_dimension_numbers<[1], [0], [0], [1], [0, 0, 1, 1], [], []>} : vector<128x128xbf16>, vector<128x128xbf16>, vector<128x128xf32> -> vector<128x128xf32>
    %c0_3 = arith.constant 0 : index
    %c0_4 = arith.constant 0 : index
    %3 = vector.load %arg3[%c0_3, %c0_4] : memref<1x128xf32, #tpu.memory_space<vmem>>, vector<1x128xf32>
    %4 = vector.broadcast %3 : vector<1x128xf32> to vector<128x128xf32>
    %5 = arith.addf %2, %4 : vector<128x128xf32>
    %6 = tpu.iota {dimensions = array<i32: 1>} : vector<1x128xi32>
    %c64_i32 = arith.constant 64 : i32
    %7 = vector.broadcast %c64_i32 : i32 to vector<1x128xi32>
    %8 = arith.cmpi slt, %6, %7 : vector<1x128xi32>
    %9 = arith.extui %8 : vector<1x128xi1> to vector<1x128xi32>
    %10 = arith.sitofp %9 : vector<1x128xi32> to vector<1x128xf32>
    %cst_5 = arith.constant dense<0.000000e+00> : vector<128xf32>
    %11 = vector.multi_reduction <add>, %5, %cst_5 [1] : vector<128x128xf32> to vector<128xf32>
    %12 = vector.shape_cast %11 : vector<128xf32> to vector<128x1xf32>
    %cst_6 = arith.constant 1.562500e-02 : f32
    %13 = vector.broadcast %cst_6 : f32 to vector<128x1xf32>
    %14 = arith.mulf %12, %13 : vector<128x1xf32>
    %15 = vector.broadcast %14 : vector<128x1xf32> to vector<128x128xf32>
    %16 = arith.subf %5, %15 : vector<128x128xf32>
    %17 = vector.broadcast %10 : vector<1x128xf32> to vector<128x128xf32>
    %18 = arith.mulf %16, %17 : vector<128x128xf32>
    %19 = arith.mulf %18, %18 : vector<128x128xf32>
    %cst_7 = arith.constant dense<0.000000e+00> : vector<128xf32>
    %20 = vector.multi_reduction <add>, %19, %cst_7 [1] : vector<128x128xf32> to vector<128xf32>
    %21 = vector.shape_cast %20 : vector<128xf32> to vector<128x1xf32>
    %cst_8 = arith.constant 1.562500e-02 : f32
    %22 = vector.broadcast %cst_8 : f32 to vector<128x1xf32>
    %23 = arith.mulf %21, %22 : vector<128x1xf32>
    %cst_9 = arith.constant 9.99999974E-6 : f32
    %24 = vector.broadcast %cst_9 : f32 to vector<128x1xf32>
    %25 = arith.addf %23, %24 : vector<128x1xf32>
    %26 = math.rsqrt %25 : vector<128x1xf32>
    %27 = vector.broadcast %26 : vector<128x1xf32> to vector<128x128xf32>
    %28 = arith.mulf %18, %27 : vector<128x128xf32>
    %c0_10 = arith.constant 0 : index
    %c0_11 = arith.constant 0 : index
    %29 = vector.load %arg4[%c0_10, %c0_11] : memref<1x128xf32, #tpu.memory_space<vmem>>, vector<1x128xf32>
    %30 = vector.broadcast %29 : vector<1x128xf32> to vector<128x128xf32>
    %31 = arith.mulf %28, %30 : vector<128x128xf32>
    %c0_12 = arith.constant 0 : index
    %c0_13 = arith.constant 0 : index
    %32 = vector.load %arg5[%c0_12, %c0_13] : memref<1x128xf32, #tpu.memory_space<vmem>>, vector<1x128xf32>
    %33 = vector.broadcast %32 : vector<1x128xf32> to vector<128x128xf32>
    %34 = arith.addf %31, %33 : vector<128x128xf32>
    %cst_14 = arith.constant 0.000000e+00 : f32
    %35 = vector.broadcast %cst_14 : f32 to vector<128x128xf32>
    %36 = arith.maximumf %34, %35 : vector<128x128xf32>
    %37 = arith.truncf %36 : vector<128x128xf32> to vector<128x128xbf16>
    %c0_15 = arith.constant 0 : index
    %c0_16 = arith.constant 0 : index
    %38 = vector.load %arg6[%c0_15, %c0_16] : memref<128x128xbf16, #tpu.memory_space<vmem>>, vector<128x128xbf16>
    %cst_17 = arith.constant dense<0.000000e+00> : vector<128x128xf32>
    %39 = tpu.matmul %37, %38, %cst_17 {dimension_numbers = #tpu.dot_dimension_numbers<[1], [0], [0], [1], [0, 0, 1, 1], [], []>} : vector<128x128xbf16>, vector<128x128xbf16>, vector<128x128xf32> -> vector<128x128xf32>
    %c0_18 = arith.constant 0 : index
    %c0_19 = arith.constant 0 : index
    %40 = vector.load %arg7[%c0_18, %c0_19] : memref<1x128xf32, #tpu.memory_space<vmem>>, vector<1x128xf32>
    %41 = vector.broadcast %40 : vector<1x128xf32> to vector<128x128xf32>
    %42 = arith.addf %39, %41 : vector<128x128xf32>
    %43 = arith.mulf %42, %42 : vector<128x128xf32>
    %cst_20 = arith.constant dense<0.000000e+00> : vector<128xf32>
    %44 = vector.multi_reduction <add>, %43, %cst_20 [1] : vector<128x128xf32> to vector<128xf32>
    %45 = vector.shape_cast %44 : vector<128xf32> to vector<128x1xf32>
    %46 = math.sqrt %45 : vector<128x1xf32>
    %cst_21 = arith.constant 9.99999996E-13 : f32
    %47 = vector.broadcast %cst_21 : f32 to vector<128x1xf32>
    %48 = arith.maximumf %46, %47 : vector<128x1xf32>
    %49 = tpu.reciprocal %48 {approx = true} : vector<128x1xf32> -> vector<128x1xf32>
    %50 = vector.broadcast %49 : vector<128x1xf32> to vector<128x128xf32>
    %51 = arith.mulf %42, %50 : vector<128x128xf32>
    %c0_22 = arith.constant 0 : index
    %c0_23 = arith.constant 0 : index
    %52 = vector.load %arg8[%c0_22, %c0_23] : memref<128x128xf32, #tpu.memory_space<vmem>>, vector<128x128xf32>
    tpu.vector_store %arg8[%c0_22, %c0_23], %51 {strides = array<i32>} : memref<128x128xf32, #tpu.memory_space<vmem>>, vector<128x128xf32>,
    return
  }
  func.func @transform_0(%arg0: i32) -> (i32, i32) {
    %c0_i32 = arith.constant 0 : i32
    %c0_i32_0 = arith.constant 0 : i32
    return %arg0, %c0_i32 : i32, i32
  }
  func.func @transform_1(%arg0: i32) -> (i32, i32) {
    %c0_i32 = arith.constant 0 : i32
    %c0_i32_0 = arith.constant 0 : i32
    %c0_i32_1 = arith.constant 0 : i32
    return %c0_i32, %c0_i32_0 : i32, i32
  }
  func.func @transform_2(%arg0: i32) -> (i32, i32) {
    %c0_i32 = arith.constant 0 : i32
    %c0_i32_0 = arith.constant 0 : i32
    %c0_i32_1 = arith.constant 0 : i32
    return %c0_i32, %c0_i32_0 : i32, i32
  }
  func.func @transform_3(%arg0: i32) -> (i32, i32) {
    %c0_i32 = arith.constant 0 : i32
    %c0_i32_0 = arith.constant 0 : i32
    %c0_i32_1 = arith.constant 0 : i32
    return %c0_i32, %c0_i32_0 : i32, i32
  }
  func.func @transform_4(%arg0: i32) -> (i32, i32) {
    %c0_i32 = arith.constant 0 : i32
    %c0_i32_0 = arith.constant 0 : i32
    %c0_i32_1 = arith.constant 0 : i32
    return %c0_i32, %c0_i32_0 : i32, i32
  }
  func.func @transform_5(%arg0: i32) -> (i32, i32) {
    %c0_i32 = arith.constant 0 : i32
    %c0_i32_0 = arith.constant 0 : i32
    %c0_i32_1 = arith.constant 0 : i32
    return %c0_i32, %c0_i32_0 : i32, i32
  }
  func.func @transform_6(%arg0: i32) -> (i32, i32) {
    %c0_i32 = arith.constant 0 : i32
    %c0_i32_0 = arith.constant 0 : i32
    %c0_i32_1 = arith.constant 0 : i32
    return %c0_i32, %c0_i32_0 : i32, i32
  }
  func.func @transform_7(%arg0: i32) -> (i32, i32) {
    %c0_i32 = arith.constant 0 : i32
    %c0_i32_0 = arith.constant 0 : i32
    return %arg0, %c0_i32 : i32, i32
  }
}

</mosaic_0001>

<llo_original>
// kernel: tpu_custom_call.1
$region0: #{tpu_custom_call.1}
  #allocation0 [shape = 'u32[]', space=smem, size = 0x4, offset = 0x4, fixed_abs, tag = 'smem constant byte address 0x4 - core index']
  #allocation1 [shape = 'u32[72,128]{1,0:T(1,128)}', space=vmem, size = 0x9000, scoped, tag = 'internal scratch']
  %s0 = inlined_call_operand.hbm [shape: bf16[256,128], index: 0, kind: input, shape index: {}]
  %s1 = inlined_call_operand.hbm [shape: bf16[128,128], index: 1, kind: input, shape index: {}]
  %s2 = inlined_call_operand.vmem [shape: f32[1,128], index: 2, kind: input, shape index: {}]
  %s3 = inlined_call_operand.vmem [shape: f32[1,128], index: 3, kind: input, shape index: {}]
  %s4 = inlined_call_operand.vmem [shape: f32[1,128], index: 4, kind: input, shape index: {}]
  %s5 = inlined_call_operand.hbm [shape: bf16[128,128], index: 5, kind: input, shape index: {}]
  %s6 = inlined_call_operand.vmem [shape: f32[1,128], index: 6, kind: input, shape index: {}]
  %s7 = inlined_call_operand.hbm [shape: f32[256,128], index: 7, kind: output, shape index: {}]
  %s8 = sld [smem:[#allocation0]]
  $region73: #{tpu_custom_call.1} parent=0
    _
  %s10 = ssub.s32 1, %s8
  %s11 = scalar_select 0, %s10, %s8
  $region1: #{tpu_custom_call.1} parent=0
    #allocation2 [shape = 'u8[65536]{0}', space=vmem, size = 0x10000, scoped, tag = 'input window, operand 0']
    #allocation3 [shape = 's32[2]{0}', space=sflag, size = 0x8, scoped, tag = 'scoped memory for tpu_custom_call.1']
    #allocation4 [shape = 's32[2]{0}', space=sflag, size = 0x8, scoped, tag = 'scoped memory for tpu_custom_call.1']
    #allocation5 [shape = 'u8[32768]{0}', space=vmem, size = 0x8000, scoped, tag = 'input window, operand 1, single buffered']
    #allocation6 [shape = 's32[1]{0}', space=sflag, size = 0x4, scoped, tag = 'scoped memory for tpu_custom_call.1']
    #allocation7 [shape = 'u8[32768]{0}', space=vmem, size = 0x8000, scoped, tag = 'input window, operand 5, single buffered']
    #allocation8 [shape = 'u8[131072]{0}', space=vmem, size = 0x20000, scoped, tag = 'output window, operand 0']
    %12 = vsyncpa [#allocation3], 0
    %s13 = scalar_lea.sflag [#allocation3], 1
    %14 = vsyncpa %s13, 0
    %15 = vsyncpa [#allocation6], 0
    %16 = vsyncpa [#allocation4], 0
    %s17 = scalar_lea.sflag [#allocation4], 1
    %18 = vsyncpa %s17, 0
    loop: start=0, step=1, limit=4
    $region2: #{tpu_custom_call.1} parent=1 // loop_pre_header
      _
    $region3: #{tpu_custom_call.1} parent=1 // loop_header
      %s20 = sphi 0, %s24
      %p21 = scmp.ge.s32.totalorder %s20, 4
      %s30 = sphi 0, %s32
      %s33 = sphi 0, %s30
      %s34 = sphi 0, %s33
      %s50 = sphi 0, %s34
      %s54 = sphi 0, %s54
      %s56 = sphi 0, %s54
      %s57 = sphi 0, %s56
      %s71 = sphi 0, %s57
      %s75 = sphi 0, %s75
      %s77 = sphi 0, %s75
      %s78 = sphi 0, %s77
      %s92 = sphi 0, %s78
      %s96 = sphi 0, %s96
      %s98 = sphi 0, %s96
      %s99 = sphi 0, %s98
      %s113 = sphi 0, %s99
      %s117 = sphi 0, %s117
      %s119 = sphi 0, %s117
      %s120 = sphi 0, %s119
      %s134 = sphi 0, %s120
      %s138 = sphi 0, %s138
      %s140 = sphi 0, %s138
      %s141 = sphi 0, %s140
      %s155 = sphi 0, %s141
      %s159 = sphi 0, %s159
      %s161 = sphi 0, %s159
      %s162 = sphi 0, %s161
      %s176 = sphi 0, %s162
      %s182 = sphi 0, %s184
      %s185 = sphi 0, %s182
      %s186 = sphi 0, %s185
      %s202 = sphi 0, %s186
    $region4: #{tpu_custom_call.1} parent=1 // loop_header_branch
      %23 = sbr.rel (%p21) target = $region8
    $region5: #{tpu_custom_call.1} parent=1 // loop_body
      %s25 = ssub.s32 %s20, 1
      %s26 = ssub.s32 %s20, 2
      %s27 = sadd.s32 %s20, 1
      %s28 = ssub.s32 %s20, %s27
      %p29 = scmp.eq.s32.totalorder %s28, 0
      %s31 = sadd.s32 %s30, 1
      %s32 = scalar_select %p29, %s30, %s31
      %p35 = pneg %p29
      %p36 = scmp.eq.s32.totalorder %s20, 1
      %p37 = por %p35, %p36
      %p38 = scmp.ne.s32.totalorder %s30, %s33
      %p39 = scmp.eq.s32.totalorder %s20, 0
      %p40 = por %p38, %p39
      %p41 = scmp.ne.s32.totalorder %s30, %s33
      %p42 = scmp.eq.s32.totalorder %s25, 1
      %p43 = por %p41, %p42
      %p44 = scmp.ne.s32.totalorder %s33, %s34
      %p45 = scmp.eq.s32.totalorder %s25, 0
      %p46 = por %p44, %p45
      %p47 = scmp.ne.s32.totalorder %s33, %s34
      %p48 = scmp.eq.s32.totalorder %s26, 1
      %p49 = por %p47, %p48
      %p51 = scmp.ne.s32.totalorder %s34, %s50
      %p52 = scmp.eq.s32.totalorder %s26, 0
      %p53 = por %p51, %p52
      %s55 = sadd.s32 %s54, 1
      %p58 = scmp.eq.s32.totalorder %s20, 1
      %p59 = scmp.ne.s32.totalorder %s54, %s56
      %p60 = scmp.eq.s32.totalorder %s20, 0
      %p61 = por %p59, %p60
      %p62 = scmp.ne.s32.totalorder %s54, %s56
      %p63 = scmp.eq.s32.totalorder %s25, 1
      %p64 = por %p62, %p63
      %p65 = scmp.ne.s32.totalorder %s56, %s57
      %p66 = scmp.eq.s32.totalorder %s25, 0
      %p67 = por %p65, %p66
      %p68 = scmp.ne.s32.totalorder %s56, %s57
      %p69 = scmp.eq.s32.totalorder %s26, 1
      %p70 = por %p68, %p69
      %p72 = scmp.ne.s32.totalorder %s57, %s71
      %p73 = scmp.eq.s32.totalorder %s26, 0
      %p74 = por %p72, %p73
      %s76 = sadd.s32 %s75, 1
      %p79 = scmp.eq.s32.totalorder %s20, 1
      %p80 = scmp.ne.s32.totalorder %s75, %s77
      %p81 = scmp.eq.s32.totalorder %s20, 0
      %p82 = por %p80, %p81
      %p83 = scmp.ne.s32.totalorder %s75, %s77
      %p84 = scmp.eq.s32.totalorder %s25, 1
      %p85 = por %p83, %p84
      %p86 = scmp.ne.s32.totalorder %s77, %s78
      %p87 = scmp.eq.s32.totalorder %s25, 0
      %p88 = por %p86, %p87
      %p89 = scmp.ne.s32.totalorder %s77, %s78
      %p90 = scmp.eq.s32.totalorder %s26, 1
      %p91 = por %p89, %p90
      %p93 = scmp.ne.s32.totalorder %s78, %s92
      %p94 = scmp.eq.s32.totalorder %s26, 0
      %p95 = por %p93, %p94
      %s97 = sadd.s32 %s96, 1
      %p100 = scmp.eq.s32.totalorder %s20, 1
      %p101 = scmp.ne.s32.totalorder %s96, %s98
      %p102 = scmp.eq.s32.totalorder %s20, 0
      %p103 = por %p101, %p102
      %p104 = scmp.ne.s32.totalorder %s96, %s98
      %p105 = scmp.eq.s32.totalorder %s25, 1
      %p106 = por %p104, %p105
      %p107 = scmp.ne.s32.totalorder %s98, %s99
      %p108 = scmp.eq.s32.totalorder %s25, 0
      %p109 = por %p107, %p108
      %p110 = scmp.ne.s32.totalorder %s98, %s99
      %p111 = scmp.eq.s32.totalorder %s26, 1
      %p112 = por %p110, %p111
      %p114 = scmp.ne.s32.totalorder %s99, %s113
      %p115 = scmp.eq.s32.totalorder %s26, 0
      %p116 = por %p114, %p115
      %s118 = sadd.s32 %s117, 1
      %p121 = scmp.eq.s32.totalorder %s20, 1
      %p122 = scmp.ne.s32.totalorder %s117, %s119
      %p123 = scmp.eq.s32.totalorder %s20, 0
      %p124 = por %p122, %p123
      %p125 = scmp.ne.s32.totalorder %s117, %s119
      %p126 = scmp.eq.s32.totalorder %s25, 1
      %p127 = por %p125, %p126
      %p128 = scmp.ne.s32.totalorder %s119, %s120
      %p129 = scmp.eq.s32.totalorder %s25, 0
      %p130 = por %p128, %p129
      %p131 = scmp.ne.s32.totalorder %s119, %s120
      %p132 = scmp.eq.s32.totalorder %s26, 1
      %p133 = por %p131, %p132
      %p135 = scmp.ne.s32.totalorder %s120, %s134
      %p136 = scmp.eq.s32.totalorder %s26, 0
      %p137 = por %p135, %p136
      %s139 = sadd.s32 %s138, 1
      %p142 = scmp.eq.s32.totalorder %s20, 1
      %p143 = scmp.ne.s32.totalorder %s138, %s140
      %p144 = scmp.eq.s32.totalorder %s20, 0
      %p145 = por %p143, %p144
      %p146 = scmp.ne.s32.totalorder %s138, %s140
      %p147 = scmp.eq.s32.totalorder %s25, 1
      %p148 = por %p146, %p147
      %p149 = scmp.ne.s32.totalorder %s140, %s141
      %p150 = scmp.eq.s32.totalorder %s25, 0
      %p151 = por %p149, %p150
      %p152 = scmp.ne.s32.totalorder %s140, %s141
      %p153 = scmp.eq.s32.totalorder %s26, 1
      %p154 = por %p152, %p153
      %p156 = scmp.ne.s32.totalorder %s141, %s155
      %p157 = scmp.eq.s32.totalorder %s26, 0
      %p158 = por %p156, %p157
      %s160 = sadd.s32 %s159, 1
      %p163 = scmp.eq.s32.totalorder %s20, 1
      %p164 = scmp.ne.s32.totalorder %s159, %s161
      %p165 = scmp.eq.s32.totalorder %s20, 0
      %p166 = por %p164, %p165
      %p167 = scmp.ne.s32.totalorder %s159, %s161
      %p168 = scmp.eq.s32.totalorder %s25, 1
      %p169 = por %p167, %p168
      %p170 = scmp.ne.s32.totalorder %s161, %s162
      %p171 = scmp.eq.s32.totalorder %s25, 0
      %p172 = por %p170, %p171
      %p173 = scmp.ne.s32.totalorder %s161, %s162
      %p174 = scmp.eq.s32.totalorder %s26, 1
      %p175 = por %p173, %p174
      %p177 = scmp.ne.s32.totalorder %s162, %s176
      %p178 = scmp.eq.s32.totalorder %s26, 0
      %p179 = por %p177, %p178
      %s180 = ssub.s32 %s20, %s27
      %p181 = scmp.eq.s32.totalorder %s180, 0
      %s183 = sadd.s32 %s182, 1
      %s184 = scalar_select %p181, %s182, %s183
      %p187 = pneg %p181
      %p188 = scmp.eq.s32.totalorder %s20, 1
      %p189 = por %p187, %p188
      %p190 = scmp.ne.s32.totalorder %s182, %s185
      %p191 = scmp.eq.s32.totalorder %s20, 0
      %p192 = por %p190, %p191
      %p193 = scmp.ne.s32.totalorder %s182, %s185
      %p194 = scmp.eq.s32.totalorder %s25, 1
      %p195 = por %p193, %p194
      %p196 = scmp.ne.s32.totalorder %s185, %s186
      %p197 = scmp.eq.s32.totalorder %s25, 0
      %p198 = por %p196, %p197
      %p199 = scmp.ne.s32.totalorder %s185, %s186
      %p200 = scmp.eq.s32.totalorder %s26, 1
      %p201 = por %p199, %p200
      %p203 = scmp.ne.s32.totalorder %s186, %s202
      %p204 = scmp.eq.s32.totalorder %s26, 0
      %p205 = por %p203, %p204
      %p206 = scmp.le.s32.totalorder 1, %s20
      %p207 = scmp.lt.s32.totalorder %s20, 3
      %p208 = pnand %p206, %p207
      %p209 = pneg %p208
      // Predicated region
      $region9: #{tpu_custom_call.1} parent=5 // pred_check
        _
      $region10: #{tpu_custom_call.1} parent=5 // pred_check_branch
        %211 = sbr.rel (%p208) target = $region12
      $region11: #{tpu_custom_call.1} parent=5 // pred_region
        %s212 = ssub.s32 %s20, 1
        // Predicated region
        $region13: #{tpu_custom_call.1} parent=11 // pred_check
          %p213 = pneg %p67
        $region14: #{tpu_custom_call.1} parent=11 // pred_check_branch
          %215 = sbr.rel (%p213) target = $region16
        $region15: #{tpu_custom_call.1} parent=11 // pred_region
          %217 = vsyncadd [#allocation6], 0
          %s218 = sshll.u32 %s1, 4
          %s219 = int_to_ptr.hbm [resolvable:$true] %s218
          %s220 = sshll.u32 [#allocation5], 4
          %s221 = int_to_ptr.vmem [resolvable:$true] %s220
          %226 = dma.hbm_to_vmem [thread:$0]  %s219, 1024, %s221, [#allocation6], 64, 64, 4
        $region16: #{tpu_custom_call.1} parent=11 // pred_fallthru
          _
        // Predicated region
        $region17: #{tpu_custom_call.1} parent=11 // pred_check
          %p227 = pneg %p88
        $region18: #{tpu_custom_call.1} parent=11 // pred_check_branch
          %229 = sbr.rel (%p227) target = $region20
        $region19: #{tpu_custom_call.1} parent=11 // pred_region
          _
        $region20: #{tpu_custom_call.1} parent=11 // pred_fallthru
          _
        // Predicated region
        $region21: #{tpu_custom_call.1} parent=11 // pred_check
          %p230 = pneg %p109
        $region22: #{tpu_custom_call.1} parent=11 // pred_check_branch
          %232 = sbr.rel (%p230) target = $region24
        $region23: #{tpu_custom_call.1} parent=11 // pred_region
          _
        $region24: #{tpu_custom_call.1} parent=11 // pred_fallthru
          _
        // Predicated region
        $region25: #{tpu_custom_call.1} parent=11 // pred_check
          %p233 = pneg %p130
        $region26: #{tpu_custom_call.1} parent=11 // pred_check_branch
          %235 = sbr.rel (%p233) target = $region28
        $region27: #{tpu_custom_call.1} parent=11 // pred_region
          _
        $region28: #{tpu_custom_call.1} parent=11 // pred_fallthru
          _
        // Predicated region
        $region29: #{tpu_custom_call.1} parent=11 // pred_check
          %p236 = pneg %p151
        $region30: #{tpu_custom_call.1} parent=11 // pred_check_branch
          %238 = sbr.rel (%p236) target = $region32
        $region31: #{tpu_custom_call.1} parent=11 // pred_region
          %240 = vsyncadd [#allocation6], 0
          %s241 = sshll.u32 %s5, 4
          %s242 = int_to_ptr.hbm [resolvable:$true] %s241
          %s243 = sshll.u32 [#allocation7], 4
          %s244 = int_to_ptr.vmem [resolvable:$true] %s243
          %249 = dma.hbm_to_vmem [thread:$0]  %s242, 1024, %s244, [#allocation6], 64, 64, 4
        $region32: #{tpu_custom_call.1} parent=11 // pred_fallthru
          _
        // Predicated region
        $region33: #{tpu_custom_call.1} parent=11 // pred_check
          %p250 = pneg %p172
        $region34: #{tpu_custom_call.1} parent=11 // pred_check_branch
          %252 = sbr.rel (%p250) target = $region36
        $region35: #{tpu_custom_call.1} parent=11 // pred_region
          _
        $region36: #{tpu_custom_call.1} parent=11 // pred_fallthru
          _
      $region12: #{tpu_custom_call.1} parent=5 // pred_fallthru
        _
      %p253 = scmp.lt.s32.totalorder %s20, 2
      // Predicated region
      $region37: #{tpu_custom_call.1} parent=5 // pred_check
        %p254 = pneg %p253
      $region38: #{tpu_custom_call.1} parent=5 // pred_check_branch
        %256 = sbr.rel (%p254) target = $region40
      $region39: #{tpu_custom_call.1} parent=5 // pred_region
        // Predicated region
        $region41: #{tpu_custom_call.1} parent=39 // pred_check
          %p257 = pneg %p40
        $region42: #{tpu_custom_call.1} parent=39 // pred_check_branch
          %259 = sbr.rel (%p257) target = $region44
        $region43: #{tpu_custom_call.1} parent=39 // pred_region
          %s260 = sand.u32 %s30, 1
          %s261 = scalar_lea.sflag [#allocation3], %s260
          %s262 = sand.u32 %s30, 1
          %s263 = smul.addr %s262, 64
          %s264 = scalar_lea.vmem [#allocation2], %s263
          %s265 = smul.u32 16, %s20
          %267 = vsyncadd %s261, 0
          %s268 = smul.addr %s265, 4
          %s269 = scalar_lea.hbm %s0, %s268
          %s270 = sshll.u32 %s269, 4
          %s271 = int_to_ptr.hbm [resolvable:$true] %s270
          %s272 = sshll.u32 %s264, 4
          %s273 = int_to_ptr.vmem [resolvable:$true] %s272
          %278 = dma.hbm_to_vmem [thread:$0]  %s271, 1024, %s273, %s261, 64, 64, 4
        $region44: #{tpu_custom_call.1} parent=39 // pred_fallthru
          _
      $region40: #{tpu_custom_call.1} parent=5 // pred_fallthru
        _
      %p279 = scmp.le.s32.totalorder 1, %s20
      %p280 = scmp.lt.s32.totalorder %s20, 3
      %p281 = pnand %p279, %p280
      %p282 = pneg %p281
      // Predicated region
      $region45: #{tpu_custom_call.1} parent=5 // pred_check
        _
      $region46: #{tpu_custom_call.1} parent=5 // pred_check_branch
        %284 = sbr.rel (%p281) target = $region48
      $region47: #{tpu_custom_call.1} parent=5 // pred_region
        %s285 = ssub.s32 %s20, 1
        %s286 = sand.u32 %s33, 1
        %s287 = scalar_lea.sflag [#allocation3], %s286
        %s288 = sand.u32 %s33, 1
        %s289 = smul.addr %s288, 64
        %s290 = scalar_lea.vmem [#allocation2], %s289
        // Predicated region
        $region49: #{tpu_custom_call.1} parent=47 // pred_check
          %p291 = pneg %p46
        $region50: #{tpu_custom_call.1} parent=47 // pred_check_branch
          %293 = sbr.rel (%p291) target = $region52
        $region51: #{tpu_custom_call.1} parent=47 // pred_region
          %295 = dma.done %s287, 1024
        $region52: #{tpu_custom_call.1} parent=47 // pred_fallthru
          _
        // Predicated region
        $region53: #{tpu_custom_call.1} parent=47 // pred_check
          %p296 = pneg %p67
        $region54: #{tpu_custom_call.1} parent=47 // pred_check_branch
          %298 = sbr.rel (%p296) target = $region56
        $region55: #{tpu_custom_call.1} parent=47 // pred_region
          %300 = dma.done [#allocation6], 1024
        $region56: #{tpu_custom_call.1} parent=47 // pred_fallthru
          _
        // Predicated region
        $region57: #{tpu_custom_call.1} parent=47 // pred_check
          %p301 = pneg %p151
        $region58: #{tpu_custom_call.1} parent=47 // pred_check_branch
          %303 = sbr.rel (%p301) target = $region60
        $region59: #{tpu_custom_call.1} parent=47 // pred_region
          %305 = dma.done [#allocation6], 1024
        $region60: #{tpu_custom_call.1} parent=47 // pred_fallthru
          _
        %s306 = sand.u32 %s33, 1
        %s307 = scalar_lea.sflag [#allocation3], %s306
        %s308 = sand.u32 %s33, 1
        %s309 = smul.addr %s308, 64
        %s310 = scalar_lea.vmem [#allocation2], %s309
        %p311 = pneg %p46
        %p312 = pneg %p43
        %p313 = pneg %p67
        %p314 = pneg %p64
        %p315 = pneg %p88
        %p316 = pneg %p85
        %p317 = pneg %p109
        %p318 = pneg %p106
        %p319 = pneg %p130
        %p320 = pneg %p127
        %p321 = pneg %p151
        %p322 = pneg %p148
        %p323 = pneg %p172
        %p324 = pneg %p169
        %p325 = pneg %p198
        %p326 = pneg %p195
        %s327 = sand.u32 %s185, 1
        %s328 = scalar_lea.sflag [#allocation4], %s327
        %s329 = sand.u32 %s185, 1
        %s330 = smul.addr %s329, 128
        %s331 = scalar_lea.vmem [#allocation8], %s330
        %s332 = smul.u32 16, %s25
        %s333 = smul.u32 16, %s25
        %v334 = vld [vmem:[%s290] sm:$0xf]
        %v335 = vld [vmem:[%s290 + $0x4] sm:$0xf]
        %v336 = vld [vmem:[%s290 + $0x8] sm:$0xf]
        %v337 = vld [vmem:[%s290 + $0xc] sm:$0xf]
        %v338 = vld [vmem:[%s290 + $0x10] sm:$0xf]
        %v339 = vld [vmem:[%s290 + $0x14] sm:$0xf]
        %v340 = vld [vmem:[%s290 + $0x18] sm:$0xf]
        %v341 = vld [vmem:[%s290 + $0x1c] sm:$0xf]
        %v342 = vld [vmem:[%s290 + $0x20] sm:$0xf]
        %v343 = vld [vmem:[%s290 + $0x24] sm:$0xf]
        %v344 = vld [vmem:[%s290 + $0x28] sm:$0xf]
        %v345 = vld [vmem:[%s290 + $0x2c] sm:$0xf]
        %v346 = vld [vmem:[%s290 + $0x30] sm:$0xf]
        %v347 = vld [vmem:[%s290 + $0x34] sm:$0xf]
        %v348 = vld [vmem:[%s290 + $0x38] sm:$0xf]
        %v349 = vld [vmem:[%s290 + $0x3c] sm:$0xf]
        %v350 = vld [vmem:[#allocation5] sm:$0xf]
        %v351 = vld [vmem:[#allocation5 + $0x4] sm:$0xf]
        %v352 = vld [vmem:[#allocation5 + $0x8] sm:$0xf]
        %v353 = vld [vmem:[#allocation5 + $0xc] sm:$0xf]
        %v354 = vld [vmem:[#allocation5 + $0x10] sm:$0xf]
        %v355 = vld [vmem:[#allocation5 + $0x14] sm:$0xf]
        %v356 = vld [vmem:[#allocation5 + $0x18] sm:$0xf]
        %v357 = vld [vmem:[#allocation5 + $0x1c] sm:$0xf]
        %v358 = vld [vmem:[#allocation5 + $0x20] sm:$0xf]
        %v359 = vld [vmem:[#allocation5 + $0x24] sm:$0xf]
        %v360 = vld [vmem:[#allocation5 + $0x28] sm:$0xf]
        %v361 = vld [vmem:[#allocation5 + $0x2c] sm:$0xf]
        %v362 = vld [vmem:[#allocation5 + $0x30] sm:$0xf]
        %v363 = vld [vmem:[#allocation5 + $0x34] sm:$0xf]
        %v364 = vld [vmem:[#allocation5 + $0x38] sm:$0xf]
        %v365 = vld [vmem:[#allocation5 + $0x3c] sm:$0xf]
        %v366 = vld [vmem:[%s2] sm:$0x1]
        %v368 = vperm.slane %v366, 0
        %v386 = vunpack.c.l.b16 %v334
        %v387 = vunpack.c.l.b16 %v335
        %v388 = vunpack.c.l.b16 %v336
        %v389 = vunpack.c.l.b16 %v337
        %v390 = vunpack.c.l.b16 %v338
        %v391 = vunpack.c.l.b16 %v339
        %v392 = vunpack.c.l.b16 %v340
        %v393 = vunpack.c.l.b16 %v341
        %v394 = vunpack.c.l.b16 %v342
        %v395 = vunpack.c.l.b16 %v343
        %v396 = vunpack.c.l.b16 %v344
        %v397 = vunpack.c.l.b16 %v345
        %v398 = vunpack.c.l.b16 %v346
        %v399 = vunpack.c.l.b16 %v347
        %v400 = vunpack.c.l.b16 %v348
        %v401 = vunpack.c.l.b16 %v349
        %v402 = vpack.c.b16 %v387, %v386
        %v403 = vpack.c.b16 %v389, %v388
        %v404 = vpack.c.b16 %v391, %v390
        %v405 = vpack.c.b16 %v393, %v392
        %v406 = vpack.c.b16 %v395, %v394
        %v407 = vpack.c.b16 %v397, %v396
        %v408 = vpack.c.b16 %v399, %v398
        %v409 = vpack.c.b16 %v401, %v400
        %v434 = vunpack.c.l.b16 %v350
        %v435 = vunpack.c.l.b16 %v351
        %v436 = vunpack.c.l.b16 %v352
        %v437 = vunpack.c.l.b16 %v353
        %v438 = vunpack.c.l.b16 %v354
        %v439 = vunpack.c.l.b16 %v355
        %v440 = vunpack.c.l.b16 %v356
        %v441 = vunpack.c.l.b16 %v357
        %v442 = vunpack.c.l.b16 %v358
        %v443 = vunpack.c.l.b16 %v359
        %v444 = vunpack.c.l.b16 %v360
        %v445 = vunpack.c.l.b16 %v361
        %v446 = vunpack.c.l.b16 %v362
        %v447 = vunpack.c.l.b16 %v363
        %v448 = vunpack.c.l.b16 %v364
        %v449 = vunpack.c.l.b16 %v365
        %v450 = vpack.c.b16 %v435, %v434
        %v451 = vpack.c.b16 %v437, %v436
        %v452 = vpack.c.b16 %v439, %v438
        %v453 = vpack.c.b16 %v441, %v440
        %v454 = vpack.c.b16 %v443, %v442
        %v455 = vpack.c.b16 %v445, %v444
        %v456 = vpack.c.b16 %v447, %v446
        %v457 = vpack.c.b16 %v449, %v448
        %466 = vmatpush.bf16.msra.mxu0 %v457
        %467 = vmatpush.bf16.msra.mxu0 %v456
        %468 = vmatpush.bf16.msra.mxu0 %v455
        %469 = vmatpush.bf16.msra.mxu0 %v454
        %470 = vmatpush.bf16.msra.mxu0 %v453
        %471 = vmatpush.bf16.msra.mxu0 %v452
        %472 = vmatpush.bf16.msra.mxu0 %v451
        %473 = vmatpush.bf16.msra.mxu0 %v450
        %474 = vmatmul.bf16.gmra.mxu0 %v402
        %v475 = vpop.f32.mrf.mxu0
        %v476 = vadd.f32 %v368, %v475
        %v477 = vpop.f32.mrf.mxu0
        %v478 = vadd.f32 %v368, %v477
        %479 = vmatmul.bf16.gmra.mxu0 %v403
        %v480 = vpop.f32.mrf.mxu0
        %v481 = vadd.f32 %v368, %v480
        %v482 = vpop.f32.mrf.mxu0
        %v483 = vadd.f32 %v368, %v482
        %484 = vmatmul.bf16.gmra.mxu0 %v404
        %v485 = vpop.f32.mrf.mxu0
        %v486 = vadd.f32 %v368, %v485
        %v487 = vpop.f32.mrf.mxu0
        %v488 = vadd.f32 %v368, %v487
        %489 = vmatmul.bf16.gmra.mxu0 %v405
        %v490 = vpop.f32.mrf.mxu0
        %v491 = vadd.f32 %v368, %v490
        %v492 = vpop.f32.mrf.mxu0
        %v493 = vadd.f32 %v368, %v492
        %494 = vmatmul.bf16.gmra.mxu0 %v406
        %v495 = vpop.f32.mrf.mxu0
        %v496 = vadd.f32 %v368, %v495
        %v497 = vpop.f32.mrf.mxu0
        %v498 = vadd.f32 %v368, %v497
        %499 = vmatmul.bf16.gmra.mxu0 %v407
        %v500 = vpop.f32.mrf.mxu0
        %v501 = vadd.f32 %v368, %v500
        %v502 = vpop.f32.mrf.mxu0
        %v503 = vadd.f32 %v368, %v502
        %504 = vmatmul.bf16.gmra.mxu0 %v408
        %v505 = vpop.f32.mrf.mxu0
        %v506 = vadd.f32 %v368, %v505
        %v507 = vpop.f32.mrf.mxu0
        %v508 = vadd.f32 %v368, %v507
        %509 = vmatmul.bf16.gmra.mxu0 %v409
        %v510 = vpop.f32.mrf.mxu0
        %v511 = vadd.f32 %v368, %v510
        %v512 = vpop.f32.mrf.mxu0
        %v513 = vadd.f32 %v368, %v512
        %514 = vdwg.mxu0
        %v515 = vlaneseq
        %v516 = vand.u32 %v515, 127
        %vm517 = vcmp.lt.s32.totalorder %v516, 64
        %v518 = vsel %vm517, 1, 0
        %v519 = vcvt.s32.f32 %v518
        %520 = vadd.xlane.f32.xlu0 %v476
        %v521 = vpop.xlane.xlu0 %520
        %522 = vadd.xlane.f32.xlu0 %v478
        %v523 = vpop.xlane.xlu0 %522
        %524 = vadd.xlane.f32.xlu0 %v481
        %v525 = vpop.xlane.xlu0 %524
        %526 = vadd.xlane.f32.xlu0 %v483
        %v527 = vpop.xlane.xlu0 %526
        %528 = vadd.xlane.f32.xlu0 %v486
        %v529 = vpop.xlane.xlu0 %528
        %530 = vadd.xlane.f32.xlu0 %v488
        %v531 = vpop.xlane.xlu0 %530
        %532 = vadd.xlane.f32.xlu0 %v491
        %v533 = vpop.xlane.xlu0 %532
        %534 = vadd.xlane.f32.xlu0 %v493
        %v535 = vpop.xlane.xlu0 %534
        %536 = vadd.xlane.f32.xlu0 %v496
        %v537 = vpop.xlane.xlu0 %536
        %538 = vadd.xlane.f32.xlu0 %v498
        %v539 = vpop.xlane.xlu0 %538
        %540 = vadd.xlane.f32.xlu0 %v501
        %v541 = vpop.xlane.xlu0 %540
        %542 = vadd.xlane.f32.xlu0 %v503
        %v543 = vpop.xlane.xlu0 %542
        %544 = vadd.xlane.f32.xlu0 %v506
        %v545 = vpop.xlane.xlu0 %544
        %546 = vadd.xlane.f32.xlu0 %v508
        %v547 = vpop.xlane.xlu0 %546
        %548 = vadd.xlane.f32.xlu0 %v511
        %v549 = vpop.xlane.xlu0 %548
        %550 = vadd.xlane.f32.xlu0 %v513
        %v551 = vpop.xlane.xlu0 %550
        %v552 = vmul.f32 %v521, 0.015625
        %v553 = vmul.f32 %v523, 0.015625
        %v554 = vmul.f32 %v525, 0.015625
        %v555 = vmul.f32 %v527, 0.015625
        %v556 = vmul.f32 %v529, 0.015625
        %v557 = vmul.f32 %v531, 0.015625
        %v558 = vmul.f32 %v533, 0.015625
        %v559 = vmul.f32 %v535, 0.015625
        %v560 = vmul.f32 %v537, 0.015625
        %v561 = vmul.f32 %v539, 0.015625
        %v562 = vmul.f32 %v541, 0.015625
        %v563 = vmul.f32 %v543, 0.015625
        %v564 = vmul.f32 %v545, 0.015625
        %v565 = vmul.f32 %v547, 0.015625
        %v566 = vmul.f32 %v549, 0.015625
        %v567 = vmul.f32 %v551, 0.015625
        %v568 = vsub.f32 %v476, %v552
        %v569 = vsub.f32 %v478, %v553
        %v570 = vsub.f32 %v481, %v554
        %v571 = vsub.f32 %v483, %v555
        %v572 = vsub.f32 %v486, %v556
        %v573 = vsub.f32 %v488, %v557
        %v574 = vsub.f32 %v491, %v558
        %v575 = vsub.f32 %v493, %v559
        %v576 = vsub.f32 %v496, %v560
        %v577 = vsub.f32 %v498, %v561
        %v578 = vsub.f32 %v501, %v562
        %v579 = vsub.f32 %v503, %v563
        %v580 = vsub.f32 %v506, %v564
        %v581 = vsub.f32 %v508, %v565
        %v582 = vsub.f32 %v511, %v566
        %v583 = vsub.f32 %v513, %v567
        %v584 = vmul.f32 %v568, %v519
        %v585 = vmul.f32 %v569, %v519
        %v586 = vmul.f32 %v570, %v519
        %v587 = vmul.f32 %v571, %v519
        %v588 = vmul.f32 %v572, %v519
        %v589 = vmul.f32 %v573, %v519
        %v590 = vmul.f32 %v574, %v519
        %v591 = vmul.f32 %v575, %v519
        %v592 = vmul.f32 %v576, %v519
        %v593 = vmul.f32 %v577, %v519
        %v594 = vmul.f32 %v578, %v519
        %v595 = vmul.f32 %v579, %v519
        %v596 = vmul.f32 %v580, %v519
        %v597 = vmul.f32 %v581, %v519
        %v598 = vmul.f32 %v582, %v519
        %v599 = vmul.f32 %v583, %v519
        %v600 = vmul.f32 %v584, %v584
        %v601 = vmul.f32 %v585, %v585
        %v602 = vmul.f32 %v586, %v586
        %v603 = vmul.f32 %v587, %v587
        %v604 = vmul.f32 %v588, %v588
        %v605 = vmul.f32 %v589, %v589
        %v606 = vmul.f32 %v590, %v590
        %v607 = vmul.f32 %v591, %v591
        %v608 = vmul.f32 %v592, %v592
        %v609 = vmul.f32 %v593, %v593
        %v610 = vmul.f32 %v594, %v594
        %v611 = vmul.f32 %v595, %v595
        %v612 = vmul.f32 %v596, %v596
        %v613 = vmul.f32 %v597, %v597
        %v614 = vmul.f32 %v598, %v598
        %v615 = vmul.f32 %v599, %v599
        %616 = vadd.xlane.f32.xlu0 %v600
        %v617 = vpop.xlane.xlu0 %616
        %618 = vadd.xlane.f32.xlu0 %v601
        %v619 = vpop.xlane.xlu0 %618
        %620 = vadd.xlane.f32.xlu0 %v602
        %v621 = vpop.xlane.xlu0 %620
        %622 = vadd.xlane.f32.xlu0 %v603
        %v623 = vpop.xlane.xlu0 %622
        %624 = vadd.xlane.f32.xlu0 %v604
        %v625 = vpop.xlane.xlu0 %624
        %626 = vadd.xlane.f32.xlu0 %v605
        %v627 = vpop.xlane.xlu0 %626
        %628 = vadd.xlane.f32.xlu0 %v606
        %v629 = vpop.xlane.xlu0 %628
        %630 = vadd.xlane.f32.xlu0 %v607
        %v631 = vpop.xlane.xlu0 %630
        %632 = vadd.xlane.f32.xlu0 %v608
        %v633 = vpop.xlane.xlu0 %632
        %634 = vadd.xlane.f32.xlu0 %v609
        %v635 = vpop.xlane.xlu0 %634
        %636 = vadd.xlane.f32.xlu0 %v610
        %v637 = vpop.xlane.xlu0 %636
        %638 = vadd.xlane.f32.xlu0 %v611
        %v639 = vpop.xlane.xlu0 %638
        %640 = vadd.xlane.f32.xlu0 %v612
        %v641 = vpop.xlane.xlu0 %640
        %642 = vadd.xlane.f32.xlu0 %v613
        %v643 = vpop.xlane.xlu0 %642
        %644 = vadd.xlane.f32.xlu0 %v614
        %v645 = vpop.xlane.xlu0 %644
        %646 = vadd.xlane.f32.xlu0 %v615
        %v647 = vpop.xlane.xlu0 %646
        %v648 = vmul.f32 %v617, 0.015625
        %v649 = vmul.f32 %v619, 0.015625
        %v650 = vmul.f32 %v621, 0.015625
        %v651 = vmul.f32 %v623, 0.015625
        %v652 = vmul.f32 %v625, 0.015625
        %v653 = vmul.f32 %v627, 0.015625
        %v654 = vmul.f32 %v629, 0.015625
        %v655 = vmul.f32 %v631, 0.015625
        %v656 = vmul.f32 %v633, 0.015625
        %v657 = vmul.f32 %v635, 0.015625
        %v658 = vmul.f32 %v637, 0.015625
        %v659 = vmul.f32 %v639, 0.015625
        %v660 = vmul.f32 %v641, 0.015625
        %v661 = vmul.f32 %v643, 0.015625
        %v662 = vmul.f32 %v645, 0.015625
        %v663 = vmul.f32 %v647, 0.015625
        %v664 = vadd.f32 %v648, 1e-05
        %v665 = vadd.f32 %v649, 1e-05
        %v666 = vadd.f32 %v650, 1e-05
        %v667 = vadd.f32 %v651, 1e-05
        %v668 = vadd.f32 %v652, 1e-05
        %v669 = vadd.f32 %v653, 1e-05
        %v670 = vadd.f32 %v654, 1e-05
        %v671 = vadd.f32 %v655, 1e-05
        %v672 = vadd.f32 %v656, 1e-05
        %v673 = vadd.f32 %v657, 1e-05
        %v674 = vadd.f32 %v658, 1e-05
        %v675 = vadd.f32 %v659, 1e-05
        %v676 = vadd.f32 %v660, 1e-05
        %v677 = vadd.f32 %v661, 1e-05
        %v678 = vadd.f32 %v662, 1e-05
        %v679 = vadd.f32 %v663, 1e-05
        %v680 = vrsqrt.pop %v664
        %v681 = vmul.f32 %v680, %v664
        %v682 = vmul.f32 %v681, %v680
        %v683 = vmul.f32 0.5, %v682
        %v684 = vsub.f32 1.5, %v683
        %v685 = vmul.f32 %v680, %v684
        %vm686 = vweird.f32 %v664
        %vm687 = vweird.f32 %v680
        %vm688 = vmor %vm686, %vm687
        %v689 = vsel %vm688, %v680, %v685
        %v690 = vrsqrt.pop %v665
        %v691 = vmul.f32 %v690, %v665
        %v692 = vmul.f32 %v691, %v690
        %v693 = vmul.f32 0.5, %v692
        %v694 = vsub.f32 1.5, %v693
        %v695 = vmul.f32 %v690, %v694
        %vm696 = vweird.f32 %v665
        %vm697 = vweird.f32 %v690
        %vm698 = vmor %vm696, %vm697
        %v699 = vsel %vm698, %v690, %v695
        %v700 = vrsqrt.pop %v666
        %v701 = vmul.f32 %v700, %v666
        %v702 = vmul.f32 %v701, %v700
        %v703 = vmul.f32 0.5, %v702
        %v704 = vsub.f32 1.5, %v703
        %v705 = vmul.f32 %v700, %v704
        %vm706 = vweird.f32 %v666
        %vm707 = vweird.f32 %v700
        %vm708 = vmor %vm706, %vm707
        %v709 = vsel %vm708, %v700, %v705
        %v710 = vrsqrt.pop %v667
        %v711 = vmul.f32 %v710, %v667
        %v712 = vmul.f32 %v711, %v710
        %v713 = vmul.f32 0.5, %v712
        %v714 = vsub.f32 1.5, %v713
        %v715 = vmul.f32 %v710, %v714
        %vm716 = vweird.f32 %v667
        %vm717 = vweird.f32 %v710
        %vm718 = vmor %vm716, %vm717
        %v719 = vsel %vm718, %v710, %v715
        %v720 = vrsqrt.pop %v668
        %v721 = vmul.f32 %v720, %v668
        %v722 = vmul.f32 %v721, %v720
        %v723 = vmul.f32 0.5, %v722
        %v724 = vsub.f32 1.5, %v723
        %v725 = vmul.f32 %v720, %v724
        %vm726 = vweird.f32 %v668
        %vm727 = vweird.f32 %v720
        %vm728 = vmor %vm726, %vm727
        %v729 = vsel %vm728, %v720, %v725
        %v730 = vrsqrt.pop %v669
        %v731 = vmul.f32 %v730, %v669
        %v732 = vmul.f32 %v731, %v730
        %v733 = vmul.f32 0.5, %v732
        %v734 = vsub.f32 1.5, %v733
        %v735 = vmul.f32 %v730, %v734
        %vm736 = vweird.f32 %v669
        %vm737 = vweird.f32 %v730
        %vm738 = vmor %vm736, %vm737
        %v739 = vsel %vm738, %v730, %v735
        %v740 = vrsqrt.pop %v670
        %v741 = vmul.f32 %v740, %v670
        %v742 = vmul.f32 %v741, %v740
        %v743 = vmul.f32 0.5, %v742
        %v744 = vsub.f32 1.5, %v743
        %v745 = vmul.f32 %v740, %v744
        %vm746 = vweird.f32 %v670
        %vm747 = vweird.f32 %v740
        %vm748 = vmor %vm746, %vm747
        %v749 = vsel %vm748, %v740, %v745
        %v750 = vrsqrt.pop %v671
        %v751 = vmul.f32 %v750, %v671
        %v752 = vmul.f32 %v751, %v750
        %v753 = vmul.f32 0.5, %v752
        %v754 = vsub.f32 1.5, %v753
        %v755 = vmul.f32 %v750, %v754
        %vm756 = vweird.f32 %v671
        %vm757 = vweird.f32 %v750
        %vm758 = vmor %vm756, %vm757
        %v759 = vsel %vm758, %v750, %v755
        %v760 = vrsqrt.pop %v672
        %v761 = vmul.f32 %v760, %v672
        %v762 = vmul.f32 %v761, %v760
        %v763 = vmul.f32 0.5, %v762
        %v764 = vsub.f32 1.5, %v763
        %v765 = vmul.f32 %v760, %v764
        %vm766 = vweird.f32 %v672
        %vm767 = vweird.f32 %v760
        %vm768 = vmor %vm766, %vm767
        %v769 = vsel %vm768, %v760, %v765
        %v770 = vrsqrt.pop %v673
        %v771 = vmul.f32 %v770, %v673
        %v772 = vmul.f32 %v771, %v770
        %v773 = vmul.f32 0.5, %v772
        %v774 = vsub.f32 1.5, %v773
        %v775 = vmul.f32 %v770, %v774
        %vm776 = vweird.f32 %v673
        %vm777 = vweird.f32 %v770
        %vm778 = vmor %vm776, %vm777
        %v779 = vsel %vm778, %v770, %v775
        %v780 = vrsqrt.pop %v674
        %v781 = vmul.f32 %v780, %v674
        %v782 = vmul.f32 %v781, %v780
        %v783 = vmul.f32 0.5, %v782
        %v784 = vsub.f32 1.5, %v783
        %v785 = vmul.f32 %v780, %v784
        %vm786 = vweird.f32 %v674
        %vm787 = vweird.f32 %v780
        %vm788 = vmor %vm786, %vm787
        %v789 = vsel %vm788, %v780, %v785
        %v790 = vrsqrt.pop %v675
        %v791 = vmul.f32 %v790, %v675
        %v792 = vmul.f32 %v791, %v790
        %v793 = vmul.f32 0.5, %v792
        %v794 = vsub.f32 1.5, %v793
        %v795 = vmul.f32 %v790, %v794
        %vm796 = vweird.f32 %v675
        %vm797 = vweird.f32 %v790
        %vm798 = vmor %vm796, %vm797
        %v799 = vsel %vm798, %v790, %v795
        %v800 = vrsqrt.pop %v676
        %v801 = vmul.f32 %v800, %v676
        %v802 = vmul.f32 %v801, %v800
        %v803 = vmul.f32 0.5, %v802
        %v804 = vsub.f32 1.5, %v803
        %v805 = vmul.f32 %v800, %v804
        %vm806 = vweird.f32 %v676
        %vm807 = vweird.f32 %v800
        %vm808 = vmor %vm806, %vm807
        %v809 = vsel %vm808, %v800, %v805
        %v810 = vrsqrt.pop %v677
        %v811 = vmul.f32 %v810, %v677
        %v812 = vmul.f32 %v811, %v810
        %v813 = vmul.f32 0.5, %v812
        %v814 = vsub.f32 1.5, %v813
        %v815 = vmul.f32 %v810, %v814
        %vm816 = vweird.f32 %v677
        %vm817 = vweird.f32 %v810
        %vm818 = vmor %vm816, %vm817
        %v819 = vsel %vm818, %v810, %v815
        %v820 = vrsqrt.pop %v678
        %v821 = vmul.f32 %v820, %v678
        %v822 = vmul.f32 %v821, %v820
        %v823 = vmul.f32 0.5, %v822
        %v824 = vsub.f32 1.5, %v823
        %v825 = vmul.f32 %v820, %v824
        %vm826 = vweird.f32 %v678
        %vm827 = vweird.f32 %v820
        %vm828 = vmor %vm826, %vm827
        %v829 = vsel %vm828, %v820, %v825
        %v830 = vrsqrt.pop %v679
        %v831 = vmul.f32 %v830, %v679
        %v832 = vmul.f32 %v831, %v830
        %v833 = vmul.f32 0.5, %v832
        %v834 = vsub.f32 1.5, %v833
        %v835 = vmul.f32 %v830, %v834
        %vm836 = vweird.f32 %v679
        %vm837 = vweird.f32 %v830
        %vm838 = vmor %vm836, %vm837
        %v839 = vsel %vm838, %v830, %v835
        %v840 = vmul.f32 %v584, %v689
        %v841 = vmul.f32 %v585, %v699
        %v842 = vmul.f32 %v586, %v709
        %v843 = vmul.f32 %v587, %v719
        %v844 = vmul.f32 %v588, %v729
        %v845 = vmul.f32 %v589, %v739
        %v846 = vmul.f32 %v590, %v749
        %v847 = vmul.f32 %v591, %v759
        %v848 = vmul.f32 %v592, %v769
        %v849 = vmul.f32 %v593, %v779
        %v850 = vmul.f32 %v594, %v789
        %v851 = vmul.f32 %v595, %v799
        %v852 = vmul.f32 %v596, %v809
        %v853 = vmul.f32 %v597, %v819
        %v854 = vmul.f32 %v598, %v829
        %v855 = vmul.f32 %v599, %v839
        %v856 = vld [vmem:[%s3] sm:$0x1]
        %v858 = vperm.slane %v856, 0
        %v860 = vmul.f32 %v840, %v858
        %v861 = vmul.f32 %v841, %v858
        %v862 = vmul.f32 %v842, %v858
        %v863 = vmul.f32 %v843, %v858
        %v864 = vmul.f32 %v844, %v858
        %v865 = vmul.f32 %v845, %v858
        %v866 = vmul.f32 %v846, %v858
        %v867 = vmul.f32 %v847, %v858
        %v868 = vmul.f32 %v848, %v858
        %v869 = vmul.f32 %v849, %v858
        %v870 = vmul.f32 %v850, %v858
        %v871 = vmul.f32 %v851, %v858
        %v872 = vmul.f32 %v852, %v858
        %v873 = vmul.f32 %v853, %v858
        %v874 = vmul.f32 %v854, %v858
        %v875 = vmul.f32 %v855, %v858
        %v876 = vld [vmem:[%s4] sm:$0x1]
        %v878 = vperm.slane %v876, 0
        %v880 = vadd.f32 %v860, %v878
        %v881 = vadd.f32 %v861, %v878
        %v882 = vadd.f32 %v862, %v878
        %v883 = vadd.f32 %v863, %v878
        %v884 = vadd.f32 %v864, %v878
        %v885 = vadd.f32 %v865, %v878
        %v886 = vadd.f32 %v866, %v878
        %v887 = vadd.f32 %v867, %v878
        %v888 = vadd.f32 %v868, %v878
        %v889 = vadd.f32 %v869, %v878
        %v890 = vadd.f32 %v870, %v878
        %v891 = vadd.f32 %v871, %v878
        %v892 = vadd.f32 %v872, %v878
        %v893 = vadd.f32 %v873, %v878
        %v894 = vadd.f32 %v874, %v878
        %v895 = vadd.f32 %v875, %v878
        %v896 = vmax.f32 %v880, 0.0
        %v897 = vmax.f32 %v881, 0.0
        %v898 = vmax.f32 %v882, 0.0
        %v899 = vmax.f32 %v883, 0.0
        %v900 = vmax.f32 %v884, 0.0
        %v901 = vmax.f32 %v885, 0.0
        %v902 = vmax.f32 %v886, 0.0
        %v903 = vmax.f32 %v887, 0.0
        %v904 = vmax.f32 %v888, 0.0
        %v905 = vmax.f32 %v889, 0.0
        %v906 = vmax.f32 %v890, 0.0
        %v907 = vmax.f32 %v891, 0.0
        %v908 = vmax.f32 %v892, 0.0
        %v909 = vmax.f32 %v893, 0.0
        %v910 = vmax.f32 %v894, 0.0
        %v911 = vmax.f32 %v895, 0.0
        %v912 = vpack.c.bf16 %v897, %v896
        %v913 = vpack.c.bf16 %v899, %v898
        %v914 = vpack.c.bf16 %v901, %v900
        %v915 = vpack.c.bf16 %v903, %v902
        %v916 = vpack.c.bf16 %v905, %v904
        %v917 = vpack.c.bf16 %v907, %v906
        %v918 = vpack.c.bf16 %v909, %v908
        %v919 = vpack.c.bf16 %v911, %v910
        %v920 = vld [vmem:[#allocation7] sm:$0xf]
        %v921 = vld [vmem:[#allocation7 + $0x4] sm:$0xf]
        %v922 = vld [vmem:[#allocation7 + $0x8] sm:$0xf]
        %v923 = vld [vmem:[#allocation7 + $0xc] sm:$0xf]
        %v924 = vld [vmem:[#allocation7 + $0x10] sm:$0xf]
        %v925 = vld [vmem:[#allocation7 + $0x14] sm:$0xf]
        %v926 = vld [vmem:[#allocation7 + $0x18] sm:$0xf]
        %v927 = vld [vmem:[#allocation7 + $0x1c] sm:$0xf]
        %v928 = vld [vmem:[#allocation7 + $0x20] sm:$0xf]
        %v929 = vld [vmem:[#allocation7 + $0x24] sm:$0xf]
        %v930 = vld [vmem:[#allocation7 + $0x28] sm:$0xf]
        %v931 = vld [vmem:[#allocation7 + $0x2c] sm:$0xf]
        %v932 = vld [vmem:[#allocation7 + $0x30] sm:$0xf]
        %v933 = vld [vmem:[#allocation7 + $0x34] sm:$0xf]
        %v934 = vld [vmem:[#allocation7 + $0x38] sm:$0xf]
        %v935 = vld [vmem:[#allocation7 + $0x3c] sm:$0xf]
        %v936 = vld [vmem:[%s6] sm:$0x1]
        %v938 = vperm.slane %v936, 0
        %v956 = vunpack.c.l.b16 %v920
        %v957 = vunpack.c.l.b16 %v921
        %v958 = vunpack.c.l.b16 %v922
        %v959 = vunpack.c.l.b16 %v923
        %v960 = vunpack.c.l.b16 %v924
        %v961 = vunpack.c.l.b16 %v925
        %v962 = vunpack.c.l.b16 %v926
        %v963 = vunpack.c.l.b16 %v927
        %v964 = vunpack.c.l.b16 %v928
        %v965 = vunpack.c.l.b16 %v929
        %v966 = vunpack.c.l.b16 %v930
        %v967 = vunpack.c.l.b16 %v931
        %v968 = vunpack.c.l.b16 %v932
        %v969 = vunpack.c.l.b16 %v933
        %v970 = vunpack.c.l.b16 %v934
        %v971 = vunpack.c.l.b16 %v935
        %v972 = vpack.c.b16 %v957, %v956
        %v973 = vpack.c.b16 %v959, %v958
        %v974 = vpack.c.b16 %v961, %v960
        %v975 = vpack.c.b16 %v963, %v962
        %v976 = vpack.c.b16 %v965, %v964
        %v977 = vpack.c.b16 %v967, %v966
        %v978 = vpack.c.b16 %v969, %v968
        %v979 = vpack.c.b16 %v971, %v970
        %988 = vmatpush.bf16.msra.mxu0 %v979
        %989 = vmatpush.bf16.msra.mxu0 %v978
        %990 = vmatpush.bf16.msra.mxu0 %v977
        %991 = vmatpush.bf16.msra.mxu0 %v976
        %992 = vmatpush.bf16.msra.mxu0 %v975
        %993 = vmatpush.bf16.msra.mxu0 %v974
        %994 = vmatpush.bf16.msra.mxu0 %v973
        %995 = vmatpush.bf16.msra.mxu0 %v972
        %996 = vmatmul.bf16.gmra.mxu0 %v912
        %v997 = vpop.f32.mrf.mxu0
        %v998 = vadd.f32 %v938, %v997
        %v999 = vpop.f32.mrf.mxu0
        %v1000 = vadd.f32 %v938, %v999
        %1001 = vmatmul.bf16.gmra.mxu0 %v913
        %v1002 = vpop.f32.mrf.mxu0
        %v1003 = vadd.f32 %v938, %v1002
        %v1004 = vpop.f32.mrf.mxu0
        %v1005 = vadd.f32 %v938, %v1004
        %1006 = vmatmul.bf16.gmra.mxu0 %v914
        %v1007 = vpop.f32.mrf.mxu0
        %v1008 = vadd.f32 %v938, %v1007
        %v1009 = vpop.f32.mrf.mxu0
        %v1010 = vadd.f32 %v938, %v1009
        %1011 = vmatmul.bf16.gmra.mxu0 %v915
        %v1012 = vpop.f32.mrf.mxu0
        %v1013 = vadd.f32 %v938, %v1012
        %v1014 = vpop.f32.mrf.mxu0
        %v1015 = vadd.f32 %v938, %v1014
        %1016 = vmatmul.bf16.gmra.mxu0 %v916
        %v1017 = vpop.f32.mrf.mxu0
        %v1018 = vadd.f32 %v938, %v1017
        %v1019 = vpop.f32.mrf.mxu0
        %v1020 = vadd.f32 %v938, %v1019
        %1021 = vmatmul.bf16.gmra.mxu0 %v917
        %v1022 = vpop.f32.mrf.mxu0
        %v1023 = vadd.f32 %v938, %v1022
        %v1024 = vpop.f32.mrf.mxu0
        %v1025 = vadd.f32 %v938, %v1024
        %1026 = vmatmul.bf16.gmra.mxu0 %v918
        %v1027 = vpop.f32.mrf.mxu0
        %v1028 = vadd.f32 %v938, %v1027
        %v1029 = vpop.f32.mrf.mxu0
        %v1030 = vadd.f32 %v938, %v1029
        %1031 = vmatmul.bf16.gmra.mxu0 %v919
        %v1032 = vpop.f32.mrf.mxu0
        %v1033 = vadd.f32 %v938, %v1032
        %v1034 = vpop.f32.mrf.mxu0
        %v1035 = vadd.f32 %v938, %v1034
        %1036 = vdwg.mxu0
        %v1037 = vmul.f32 %v998, %v998
        %v1038 = vmul.f32 %v1000, %v1000
        %v1039 = vmul.f32 %v1003, %v1003
        %v1040 = vmul.f32 %v1005, %v1005
        %v1041 = vmul.f32 %v1008, %v1008
        %v1042 = vmul.f32 %v1010, %v1010
        %v1043 = vmul.f32 %v1013, %v1013
        %v1044 = vmul.f32 %v1015, %v1015
        %v1045 = vmul.f32 %v1018, %v1018
        %v1046 = vmul.f32 %v1020, %v1020
        %v1047 = vmul.f32 %v1023, %v1023
        %v1048 = vmul.f32 %v1025, %v1025
        %v1049 = vmul.f32 %v1028, %v1028
        %v1050 = vmul.f32 %v1030, %v1030
        %v1051 = vmul.f32 %v1033, %v1033
        %v1052 = vmul.f32 %v1035, %v1035
        %1053 = vadd.xlane.f32.xlu0 %v1037
        %v1054 = vpop.xlane.xlu0 %1053
        %1055 = vadd.xlane.f32.xlu0 %v1038
        %v1056 = vpop.xlane.xlu0 %1055
        %1057 = vadd.xlane.f32.xlu0 %v1039
        %v1058 = vpop.xlane.xlu0 %1057
        %1059 = vadd.xlane.f32.xlu0 %v1040
        %v1060 = vpop.xlane.xlu0 %1059
        %1061 = vadd.xlane.f32.xlu0 %v1041
        %v1062 = vpop.xlane.xlu0 %1061
        %1063 = vadd.xlane.f32.xlu0 %v1042
        %v1064 = vpop.xlane.xlu0 %1063
        %1065 = vadd.xlane.f32.xlu0 %v1043
        %v1066 = vpop.xlane.xlu0 %1065
        %1067 = vadd.xlane.f32.xlu0 %v1044
        %v1068 = vpop.xlane.xlu0 %1067
        %1069 = vadd.xlane.f32.xlu0 %v1045
        %v1070 = vpop.xlane.xlu0 %1069
        %1071 = vadd.xlane.f32.xlu0 %v1046
        %v1072 = vpop.xlane.xlu0 %1071
        %1073 = vadd.xlane.f32.xlu0 %v1047
        %v1074 = vpop.xlane.xlu0 %1073
        %1075 = vadd.xlane.f32.xlu0 %v1048
        %v1076 = vpop.xlane.xlu0 %1075
        %1077 = vadd.xlane.f32.xlu0 %v1049
        %v1078 = vpop.xlane.xlu0 %1077
        %1079 = vadd.xlane.f32.xlu0 %v1050
        %v1080 = vpop.xlane.xlu0 %1079
        %1081 = vadd.xlane.f32.xlu0 %v1051
        %v1082 = vpop.xlane.xlu0 %1081
        %1083 = vadd.xlane.f32.xlu0 %v1052
        %v1084 = vpop.xlane.xlu0 %1083
        %v1085 = vrsqrt.pop %v1054
        %v1086 = vmul.f32 %v1085, %v1054
        %v1087 = vmul.f32 %v1086, %v1085
        %v1088 = vmul.f32 0.5, %v1087
        %v1089 = vsub.f32 1.5, %v1088
        %v1090 = vmul.f32 %v1085, %v1089
        %v1091 = vmul.f32 %v1054, %v1090
        %vm1092 = vcmp.eq.f32.partialorder %v1054, inf
        %v1093 = vsel %vm1092, %v1054, %v1091
        %vm1094 = vcmp.eq.f32.partialorder %v1054, 0.0
        %v1095 = vand.u32 %v1054, 2147483648
        %v1096 = vsel %vm1094, %v1095, %v1093
        %v1097 = vrsqrt.pop %v1056
        %v1098 = vmul.f32 %v1097, %v1056
        %v1099 = vmul.f32 %v1098, %v1097
        %v1100 = vmul.f32 0.5, %v1099
        %v1101 = vsub.f32 1.5, %v1100
        %v1102 = vmul.f32 %v1097, %v1101
        %v1103 = vmul.f32 %v1056, %v1102
        %vm1104 = vcmp.eq.f32.partialorder %v1056, inf
        %v1105 = vsel %vm1104, %v1056, %v1103
        %vm1106 = vcmp.eq.f32.partialorder %v1056, 0.0
        %v1107 = vand.u32 %v1056, 2147483648
        %v1108 = vsel %vm1106, %v1107, %v1105
        %v1109 = vrsqrt.pop %v1058
        %v1110 = vmul.f32 %v1109, %v1058
        %v1111 = vmul.f32 %v1110, %v1109
        %v1112 = vmul.f32 0.5, %v1111
        %v1113 = vsub.f32 1.5, %v1112
        %v1114 = vmul.f32 %v1109, %v1113
        %v1115 = vmul.f32 %v1058, %v1114
        %vm1116 = vcmp.eq.f32.partialorder %v1058, inf
        %v1117 = vsel %vm1116, %v1058, %v1115
        %vm1118 = vcmp.eq.f32.partialorder %v1058, 0.0
        %v1119 = vand.u32 %v1058, 2147483648
        %v1120 = vsel %vm1118, %v1119, %v1117
        %v1121 = vrsqrt.pop %v1060
        %v1122 = vmul.f32 %v1121, %v1060
        %v1123 = vmul.f32 %v1122, %v1121
        %v1124 = vmul.f32 0.5, %v1123
        %v1125 = vsub.f32 1.5, %v1124
        %v1126 = vmul.f32 %v1121, %v1125
        %v1127 = vmul.f32 %v1060, %v1126
        %vm1128 = vcmp.eq.f32.partialorder %v1060, inf
        %v1129 = vsel %vm1128, %v1060, %v1127
        %vm1130 = vcmp.eq.f32.partialorder %v1060, 0.0
        %v1131 = vand.u32 %v1060, 2147483648
        %v1132 = vsel %vm1130, %v1131, %v1129
        %v1133 = vrsqrt.pop %v1062
        %v1134 = vmul.f32 %v1133, %v1062
        %v1135 = vmul.f32 %v1134, %v1133
        %v1136 = vmul.f32 0.5, %v1135
        %v1137 = vsub.f32 1.5, %v1136
        %v1138 = vmul.f32 %v1133, %v1137
        %v1139 = vmul.f32 %v1062, %v1138
        %vm1140 = vcmp.eq.f32.partialorder %v1062, inf
        %v1141 = vsel %vm1140, %v1062, %v1139
        %vm1142 = vcmp.eq.f32.partialorder %v1062, 0.0
        %v1143 = vand.u32 %v1062, 2147483648
        %v1144 = vsel %vm1142, %v1143, %v1141
        %v1145 = vrsqrt.pop %v1064
        %v1146 = vmul.f32 %v1145, %v1064
        %v1147 = vmul.f32 %v1146, %v1145
        %v1148 = vmul.f32 0.5, %v1147
        %v1149 = vsub.f32 1.5, %v1148
        %v1150 = vmul.f32 %v1145, %v1149
        %v1151 = vmul.f32 %v1064, %v1150
        %vm1152 = vcmp.eq.f32.partialorder %v1064, inf
        %v1153 = vsel %vm1152, %v1064, %v1151
        %vm1154 = vcmp.eq.f32.partialorder %v1064, 0.0
        %v1155 = vand.u32 %v1064, 2147483648
        %v1156 = vsel %vm1154, %v1155, %v1153
        %v1157 = vrsqrt.pop %v1066
        %v1158 = vmul.f32 %v1157, %v1066
        %v1159 = vmul.f32 %v1158, %v1157
        %v1160 = vmul.f32 0.5, %v1159
        %v1161 = vsub.f32 1.5, %v1160
        %v1162 = vmul.f32 %v1157, %v1161
        %v1163 = vmul.f32 %v1066, %v1162
        %vm1164 = vcmp.eq.f32.partialorder %v1066, inf
        %v1165 = vsel %vm1164, %v1066, %v1163
        %vm1166 = vcmp.eq.f32.partialorder %v1066, 0.0
        %v1167 = vand.u32 %v1066, 2147483648
        %v1168 = vsel %vm1166, %v1167, %v1165
        %v1169 = vrsqrt.pop %v1068
        %v1170 = vmul.f32 %v1169, %v1068
        %v1171 = vmul.f32 %v1170, %v1169
        %v1172 = vmul.f32 0.5, %v1171
        %v1173 = vsub.f32 1.5, %v1172
        %v1174 = vmul.f32 %v1169, %v1173
        %v1175 = vmul.f32 %v1068, %v1174
        %vm1176 = vcmp.eq.f32.partialorder %v1068, inf
        %v1177 = vsel %vm1176, %v1068, %v1175
        %vm1178 = vcmp.eq.f32.partialorder %v1068, 0.0
        %v1179 = vand.u32 %v1068, 2147483648
        %v1180 = vsel %vm1178, %v1179, %v1177
        %v1181 = vrsqrt.pop %v1070
        %v1182 = vmul.f32 %v1181, %v1070
        %v1183 = vmul.f32 %v1182, %v1181
        %v1184 = vmul.f32 0.5, %v1183
        %v1185 = vsub.f32 1.5, %v1184
        %v1186 = vmul.f32 %v1181, %v1185
        %v1187 = vmul.f32 %v1070, %v1186
        %vm1188 = vcmp.eq.f32.partialorder %v1070, inf
        %v1189 = vsel %vm1188, %v1070, %v1187
        %vm1190 = vcmp.eq.f32.partialorder %v1070, 0.0
        %v1191 = vand.u32 %v1070, 2147483648
        %v1192 = vsel %vm1190, %v1191, %v1189
        %v1193 = vrsqrt.pop %v1072
        %v1194 = vmul.f32 %v1193, %v1072
        %v1195 = vmul.f32 %v1194, %v1193
        %v1196 = vmul.f32 0.5, %v1195
        %v1197 = vsub.f32 1.5, %v1196
        %v1198 = vmul.f32 %v1193, %v1197
        %v1199 = vmul.f32 %v1072, %v1198
        %vm1200 = vcmp.eq.f32.partialorder %v1072, inf
        %v1201 = vsel %vm1200, %v1072, %v1199
        %vm1202 = vcmp.eq.f32.partialorder %v1072, 0.0
        %v1203 = vand.u32 %v1072, 2147483648
        %v1204 = vsel %vm1202, %v1203, %v1201
        %v1205 = vrsqrt.pop %v1074
        %v1206 = vmul.f32 %v1205, %v1074
        %v1207 = vmul.f32 %v1206, %v1205
        %v1208 = vmul.f32 0.5, %v1207
        %v1209 = vsub.f32 1.5, %v1208
        %v1210 = vmul.f32 %v1205, %v1209
        %v1211 = vmul.f32 %v1074, %v1210
        %vm1212 = vcmp.eq.f32.partialorder %v1074, inf
        %v1213 = vsel %vm1212, %v1074, %v1211
        %vm1214 = vcmp.eq.f32.partialorder %v1074, 0.0
        %v1215 = vand.u32 %v1074, 2147483648
        %v1216 = vsel %vm1214, %v1215, %v1213
        %v1217 = vrsqrt.pop %v1076
        %v1218 = vmul.f32 %v1217, %v1076
        %v1219 = vmul.f32 %v1218, %v1217
        %v1220 = vmul.f32 0.5, %v1219
        %v1221 = vsub.f32 1.5, %v1220
        %v1222 = vmul.f32 %v1217, %v1221
        %v1223 = vmul.f32 %v1076, %v1222
        %vm1224 = vcmp.eq.f32.partialorder %v1076, inf
        %v1225 = vsel %vm1224, %v1076, %v1223
        %vm1226 = vcmp.eq.f32.partialorder %v1076, 0.0
        %v1227 = vand.u32 %v1076, 2147483648
        %v1228 = vsel %vm1226, %v1227, %v1225
        %v1229 = vrsqrt.pop %v1078
        %v1230 = vmul.f32 %v1229, %v1078
        %v1231 = vmul.f32 %v1230, %v1229
        %v1232 = vmul.f32 0.5, %v1231
        %v1233 = vsub.f32 1.5, %v1232
        %v1234 = vmul.f32 %v1229, %v1233
        %v1235 = vmul.f32 %v1078, %v1234
        %vm1236 = vcmp.eq.f32.partialorder %v1078, inf
        %v1237 = vsel %vm1236, %v1078, %v1235
        %vm1238 = vcmp.eq.f32.partialorder %v1078, 0.0
        %v1239 = vand.u32 %v1078, 2147483648
        %v1240 = vsel %vm1238, %v1239, %v1237
        %v1241 = vrsqrt.pop %v1080
        %v1242 = vmul.f32 %v1241, %v1080
        %v1243 = vmul.f32 %v1242, %v1241
        %v1244 = vmul.f32 0.5, %v1243
        %v1245 = vsub.f32 1.5, %v1244
        %v1246 = vmul.f32 %v1241, %v1245
        %v1247 = vmul.f32 %v1080, %v1246
        %vm1248 = vcmp.eq.f32.partialorder %v1080, inf
        %v1249 = vsel %vm1248, %v1080, %v1247
        %vm1250 = vcmp.eq.f32.partialorder %v1080, 0.0
        %v1251 = vand.u32 %v1080, 2147483648
        %v1252 = vsel %vm1250, %v1251, %v1249
        %v1253 = vrsqrt.pop %v1082
        %v1254 = vmul.f32 %v1253, %v1082
        %v1255 = vmul.f32 %v1254, %v1253
        %v1256 = vmul.f32 0.5, %v1255
        %v1257 = vsub.f32 1.5, %v1256
        %v1258 = vmul.f32 %v1253, %v1257
        %v1259 = vmul.f32 %v1082, %v1258
        %vm1260 = vcmp.eq.f32.partialorder %v1082, inf
        %v1261 = vsel %vm1260, %v1082, %v1259
        %vm1262 = vcmp.eq.f32.partialorder %v1082, 0.0
        %v1263 = vand.u32 %v1082, 2147483648
        %v1264 = vsel %vm1262, %v1263, %v1261
        %v1265 = vrsqrt.pop %v1084
        %v1266 = vmul.f32 %v1265, %v1084
        %v1267 = vmul.f32 %v1266, %v1265
        %v1268 = vmul.f32 0.5, %v1267
        %v1269 = vsub.f32 1.5, %v1268
        %v1270 = vmul.f32 %v1265, %v1269
        %v1271 = vmul.f32 %v1084, %v1270
        %vm1272 = vcmp.eq.f32.partialorder %v1084, inf
        %v1273 = vsel %vm1272, %v1084, %v1271
        %vm1274 = vcmp.eq.f32.partialorder %v1084, 0.0
        %v1275 = vand.u32 %v1084, 2147483648
        %v1276 = vsel %vm1274, %v1275, %v1273
        %v1277 = vmax.f32 %v1096, 1e-12
        %v1278 = vmax.f32 %v1108, 1e-12
        %v1279 = vmax.f32 %v1120, 1e-12
        %v1280 = vmax.f32 %v1132, 1e-12
        %v1281 = vmax.f32 %v1144, 1e-12
        %v1282 = vmax.f32 %v1156, 1e-12
        %v1283 = vmax.f32 %v1168, 1e-12
        %v1284 = vmax.f32 %v1180, 1e-12
        %v1285 = vmax.f32 %v1192, 1e-12
        %v1286 = vmax.f32 %v1204, 1e-12
        %v1287 = vmax.f32 %v1216, 1e-12
        %v1288 = vmax.f32 %v1228, 1e-12
        %v1289 = vmax.f32 %v1240, 1e-12
        %v1290 = vmax.f32 %v1252, 1e-12
        %v1291 = vmax.f32 %v1264, 1e-12
        %v1292 = vmax.f32 %v1276, 1e-12
        %v1293 = vrcp.pop %v1277
        %v1294 = vrcp.pop %v1278
        %v1295 = vrcp.pop %v1279
        %v1296 = vrcp.pop %v1280
        %v1297 = vrcp.pop %v1281
        %v1298 = vrcp.pop %v1282
        %v1299 = vrcp.pop %v1283
        %v1300 = vrcp.pop %v1284
        %v1301 = vrcp.pop %v1285
        %v1302 = vrcp.pop %v1286
        %v1303 = vrcp.pop %v1287
        %v1304 = vrcp.pop %v1288
        %v1305 = vrcp.pop %v1289
        %v1306 = vrcp.pop %v1290
        %v1307 = vrcp.pop %v1291
        %v1308 = vrcp.pop %v1292
        %v1309 = vmul.f32 %v998, %v1293
        %v1310 = vmul.f32 %v1000, %v1294
        %v1311 = vmul.f32 %v1003, %v1295
        %v1312 = vmul.f32 %v1005, %v1296
        %v1313 = vmul.f32 %v1008, %v1297
        %v1314 = vmul.f32 %v1010, %v1298
        %v1315 = vmul.f32 %v1013, %v1299
        %v1316 = vmul.f32 %v1015, %v1300
        %v1317 = vmul.f32 %v1018, %v1301
        %v1318 = vmul.f32 %v1020, %v1302
        %v1319 = vmul.f32 %v1023, %v1303
        %v1320 = vmul.f32 %v1025, %v1304
        %v1321 = vmul.f32 %v1028, %v1305
        %v1322 = vmul.f32 %v1030, %v1306
        %v1323 = vmul.f32 %v1033, %v1307
        %v1324 = vmul.f32 %v1035, %v1308
        %1325 = vst [vmem:[%s331] sm:$0xff] %v1309
        %1326 = vst [vmem:[%s331 + $0x8] sm:$0xff] %v1310
        %1327 = vst [vmem:[%s331 + $0x10] sm:$0xff] %v1311
        %1328 = vst [vmem:[%s331 + $0x18] sm:$0xff] %v1312
        %1329 = vst [vmem:[%s331 + $0x20] sm:$0xff] %v1313
        %1330 = vst [vmem:[%s331 + $0x28] sm:$0xff] %v1314
        %1331 = vst [vmem:[%s331 + $0x30] sm:$0xff] %v1315
        %1332 = vst [vmem:[%s331 + $0x38] sm:$0xff] %v1316
        %1333 = vst [vmem:[%s331 + $0x40] sm:$0xff] %v1317
        %1334 = vst [vmem:[%s331 + $0x48] sm:$0xff] %v1318
        %1335 = vst [vmem:[%s331 + $0x50] sm:$0xff] %v1319
        %1336 = vst [vmem:[%s331 + $0x58] sm:$0xff] %v1320
        %1337 = vst [vmem:[%s331 + $0x60] sm:$0xff] %v1321
        %1338 = vst [vmem:[%s331 + $0x68] sm:$0xff] %v1322
        %1339 = vst [vmem:[%s331 + $0x70] sm:$0xff] %v1323
        %1340 = vst [vmem:[%s331 + $0x78] sm:$0xff] %v1324
        %s1341 = sand.u32 %s185, 1
        %s1342 = scalar_lea.sflag [#allocation4], %s1341
        %s1343 = sand.u32 %s185, 1
        %s1344 = smul.addr %s1343, 128
        %s1345 = scalar_lea.vmem [#allocation8], %s1344
        // Predicated region
        $region61: #{tpu_custom_call.1} parent=47 // pred_check
          %p1346 = pneg %p195
        $region62: #{tpu_custom_call.1} parent=47 // pred_check_branch
          %1348 = sbr.rel (%p1346) target = $region64
        $region63: #{tpu_custom_call.1} parent=47 // pred_region
          %s1349 = smul.u32 16, %s25
          %1351 = vsyncadd %s1342, 0
          %s1352 = smul.addr %s1349, 8
          %s1353 = scalar_lea.hbm %s7, %s1352
          %s1354 = sshll.u32 %s1345, 4
          %s1355 = int_to_ptr.vmem [resolvable:$true] %s1354
          %s1356 = sshll.u32 %s1353, 4
          %s1357 = int_to_ptr.hbm [resolvable:$true] %s1356
          %1362 = dma.vmem_to_hbm [thread:$0]  %s1355, 2048, %s1357, %s1342, 128, 128, 8
        $region64: #{tpu_custom_call.1} parent=47 // pred_fallthru
          _
      $region48: #{tpu_custom_call.1} parent=5 // pred_fallthru
        _
      %p1363 = scmp.le.s32.totalorder 2, %s20
      // Predicated region
      $region65: #{tpu_custom_call.1} parent=5 // pred_check
        %p1364 = pneg %p1363
      $region66: #{tpu_custom_call.1} parent=5 // pred_check_branch
        %1366 = sbr.rel (%p1364) target = $region68
      $region67: #{tpu_custom_call.1} parent=5 // pred_region
        %s1367 = ssub.s32 %s20, 2
        // Predicated region
        $region69: #{tpu_custom_call.1} parent=67 // pred_check
          %p1368 = pneg %p201
        $region70: #{tpu_custom_call.1} parent=67 // pred_check_branch
          %1370 = sbr.rel (%p1368) target = $region72
        $region71: #{tpu_custom_call.1} parent=67 // pred_region
          %s1371 = sand.u32 %s186, 1
          %s1372 = scalar_lea.sflag [#allocation4], %s1371
          %s1373 = sand.u32 %s186, 1
          %s1374 = smul.addr %s1373, 128
          %s1375 = scalar_lea.vmem [#allocation8], %s1374
          %1377 = dma.done %s1372, 2048
        $region72: #{tpu_custom_call.1} parent=67 // pred_fallthru
          _
      $region68: #{tpu_custom_call.1} parent=5 // pred_fallthru
        _
    $region6: #{tpu_custom_call.1} parent=1 // loop_footer
      %s24 = sadd.s32 1, %s20
    $region7: #{tpu_custom_call.1} parent=1 // loop_footer_branch
      %19 = sbr.rel target = $region3
    $region8: #{tpu_custom_call.1} parent=1 // loop_exit
      _
    %1378 = vsyncpa [#allocation3], 1
    %s1379 = scalar_lea.sflag [#allocation3], 1
    %1380 = vsyncpa %s1379, 1
    %1381 = vsyncpa [#allocation6], 1
    %1382 = vsyncpa [#allocation4], 1
    %s1383 = scalar_lea.sflag [#allocation4], 1
    %1384 = vsyncpa %s1383, 1

</llo_original>
